<compile_context>
chip_gen: v5e
topology: v5e:2x2
jax: 0.10.0
libtpu: 0.0.40
codegen_flags: <defaults>
</compile_context>

<pallas_src>
import functools
import numpy as np

import jax
import jax.numpy as jnp
from jax.experimental import pallas as pl
from jax.experimental.pallas import tpu as pltpu

INV_SQRT2 = 0.7071067811865476
LN_EPS = 1e-5  # torch.nn.LayerNorm default (timm Block default norm_layer)

_SINGLE_BUFFER = True          # flipped off if pl.Buffered(1) is unsupported
_VMEM_LIMIT_CACHE = None


# ----------------------------------------------------------------------------
# Hardware-aware knobs
# ----------------------------------------------------------------------------
def _vmem_limit_bytes():
    """~85% of physical VMEM (v5e/v6e 128MiB -> ~109MiB, v7x 64MiB -> ~54MiB),
    clamped, with a conservative fallback if the query is unavailable."""
    global _VMEM_LIMIT_CACHE
    if _VMEM_LIMIT_CACHE is None:
        try:
            cap = int(pltpu.get_tpu_info().vmem_capacity_bytes)
        except Exception:
            cap = 64 * 1024 * 1024
        _VMEM_LIMIT_CACHE = int(max(32 * 1024 * 1024,
                                    min(cap * 0.85, 112 * 1024 * 1024)))
    return _VMEM_LIMIT_CACHE


def _const_spec(shape, single_buffer):
    """BlockSpec for a grid-invariant operand (weights / biases / LN params).
    Single-buffered when supported so constant blocks don't take 2x VMEM."""
    idx = lambda i: (0,) * len(shape)
    if single_buffer:
        return pl.BlockSpec(shape, idx, pipeline_mode=pl.Buffered(1))
    return pl.BlockSpec(shape, idx)


def _robust(fn, *args, **kwargs):
    """Try the single-buffered (Buffered(1)) variant; fall back permanently to
    default (double-buffered) specs if this jax build rejects it."""
    global _SINGLE_BUFFER
    if _SINGLE_BUFFER:
        try:
            out = fn(*args, single_buffer=True, **kwargs)
            jax.block_until_ready(out)
            return out
        except Exception:
            _SINGLE_BUFFER = False
    return fn(*args, single_buffer=False, **kwargs)


def _pick_patch_block(batch):
    """Images per grid step for the patch-embed kernel (grid >= 2 steps)."""
    for c in (8, 4, 2, 1):
        if batch % c == 0 and batch // c >= 2:
            return c
    return 1


def _pick_b_block(batch, t_pad, emb_dim, hidden_dim):
    """Images per grid step for the transformer block: prefer >= 4 (then >= 2)
    grid steps for TC sharding / DMA overlap, subject to a VMEM budget for the
    per-step f32 intermediates (x, qkv, attn, MLP hidden, scores)."""
    vmem = _vmem_limit_bytes()
    per_row = 4 * (8 * emb_dim + hidden_dim + 2 * t_pad)          # f32 bytes
    weight_bytes = (2 * (4 * emb_dim * emb_dim + 2 * emb_dim * hidden_dim)
                    + 4 * (8 * emb_dim + hidden_dim))              # bf16 + f32
    budget = max(vmem - 2 * weight_bytes, vmem // 3)
    divisors = [c for c in (8, 4, 2, 1) if batch % c == 0]
    for min_steps in (4, 2, 1):
        for c in divisors:
            if batch // c >= min_steps and c * t_pad * per_row <= budget:
                return c
    return 1


# ----------------------------------------------------------------------------
# In-kernel helpers
# ----------------------------------------------------------------------------
def _layernorm(x, w, b, eps=LN_EPS):
    mu = jnp.mean(x, axis=-1, keepdims=True)
    var = jnp.mean((x - mu) ** 2, axis=-1, keepdims=True)
    return (x - mu) * jax.lax.rsqrt(var + eps) * w + b


# ----------------------------------------------------------------------------
# Kernel: patch embedding (Conv2d as flattened-patch matmul) + bias + pos_emb
# ----------------------------------------------------------------------------
def patchify_kernel(x_ref, w_ref, b_ref, pos_ref, o_ref):
    acc = jnp.dot(x_ref[...], w_ref[...], preferred_element_type=jnp.float32)
    o_ref[...] = (acc + b_ref[...] + pos_ref[...]).astype(o_ref.dtype)


def patch_embed(patches_btp, w_flat, bias_row, pos_tc, b_block, *,
                single_buffer):
    B, T, P = patches_btp.shape
    C = w_flat.shape[1]
    rows = b_block * T
    x2d = patches_btp.reshape(B * T, P).astype(jnp.bfloat16)
    pos_tile = jnp.tile(pos_tc, (b_block, 1))                      # [rows, C]
    cs = lambda shape: _const_spec(shape, single_buffer)
    out = pl.pallas_call(
        patchify_kernel,
        out_shape=jax.ShapeDtypeStruct((B * T, C), jnp.bfloat16),
        grid=(B // b_block,),
        in_specs=[
            pl.BlockSpec((rows, P), lambda i: (i, 0)),   # flattened patches
            cs((P, C)),                                  # conv weight (bf16)
            cs((1, C)),                                  # conv bias   (f32)
            cs((rows, C)),                               # pos emb tile (f32)
        ],
        out_specs=pl.BlockSpec((rows, C), lambda i: (i, 0)),
        compiler_params=pltpu.CompilerParams(
            dimension_semantics=("parallel",),
            vmem_limit_bytes=_vmem_limit_bytes()),
    )(x2d, w_flat, bias_row, pos_tile)
    return out.reshape(B, T, C)


# ----------------------------------------------------------------------------
# Kernel: one ViT Block (pre-norm MHA + pre-norm MLP) on [Bblk*Tpad, C] rows,
# optionally fusing the encoder's final LayerNorm.
# ----------------------------------------------------------------------------
def block_kernel(x_ref, ln1w, ln1b, wqkv, wproj, bproj, ln2w, ln2b,
                 wfc1, bfc1, wfc2, bfc2, lnfw, lnfb, o_ref, attn_ref, *,
                 num_heads, b_block, t_pad, t_valid, apply_final_ln):
    x = x_ref[...].astype(jnp.float32)            # [M, C], M = b_block * t_pad
    M, C = x.shape
    Dh = C // num_heads
    scale = Dh ** -0.5

    # --- attention branch (qkv_bias=False, timm Block default) ---
    h = _layernorm(x, ln1w[...], ln1b[...]).astype(jnp.bfloat16)
    qkv = jnp.dot(h, wqkv[...], preferred_element_type=jnp.float32)   # [M, 3C]

    q_all = (qkv[:, :C] * scale).reshape(b_block, t_pad, C).astype(jnp.bfloat16)
    k_all = qkv[:, C:2 * C].reshape(b_block, t_pad, C).astype(jnp.bfloat16)
    v_all = qkv[:, 2 * C:].reshape(b_block, t_pad, C).astype(jnp.bfloat16)

    # static key-validity mask for the padded tail of the sequence
    key_ok = jax.lax.broadcasted_iota(jnp.int32, (1, 1, t_pad), 2) < t_valid

    # TODO(synk): for very large C on v7x, tile the per-head loop / MLP over
    # row chunks with a fori_loop instead of relying on a smaller b_block.
    for hd in range(num_heads):
        q = q_all[:, :, hd * Dh:(hd + 1) * Dh]
        k = k_all[:, :, hd * Dh:(hd + 1) * Dh]
        v = v_all[:, :, hd * Dh:(hd + 1) * Dh]
        # scores [b, t, t]: batched over the batch dim, contract over Dh
        s = jax.lax.dot_general(q, k, (((2,), (2,)), ((0,), (0,))),
                                preferred_element_type=jnp.float32)
        s = jnp.where(key_ok, s, -1e30)
        s = s - jnp.max(s, axis=-1, keepdims=True)
        p = jnp.exp(s)
        p = p * pl.reciprocal(jnp.sum(p, axis=-1, keepdims=True), approx=True)
        pv = jax.lax.dot_general(p.astype(jnp.bfloat16), v,
                                 (((2,), (1,)), ((0,), (0,))),
                                 preferred_element_type=jnp.float32)  # [b,t,Dh]
        # stage head output; single full-K projection matmul afterwards
        attn_ref[:, hd * Dh:(hd + 1) * Dh] = pv.reshape(M, Dh)

    attn = jnp.dot(attn_ref[...].astype(jnp.bfloat16), wproj[...],
                   preferred_element_type=jnp.float32) + bproj[...]
    x = x + attn

    # --- MLP branch ---
    h2 = _layernorm(x, ln2w[...], ln2b[...]).astype(jnp.bfloat16)
    h2 = jnp.dot(h2, wfc1[...], preferred_element_type=jnp.float32) + bfc1[...]
    # exact (erf-based) GELU, matching torch.nn.GELU default
    h2 = 0.5 * h2 * (1.0 + jax.lax.erf(h2 * INV_SQRT2))
    h2 = jnp.dot(h2.astype(jnp.bfloat16), wfc2[...],
                 preferred_element_type=jnp.float32) + bfc2[...]
    x = x + h2

    if apply_final_ln:
        x = _layernorm(x, lnfw[...], lnfb[...])
    o_ref[...] = x.astype(o_ref.dtype)


def transformer_block(x2d, p, ln_f, *, num_heads, b_block, t_pad, t_valid,
                      apply_final_ln, single_buffer):
    n_rows, C = x2d.shape
    rows = b_block * t_pad
    grid_b = n_rows // rows
    H4 = p["w_fc1"].shape[1]
    out_dtype = jnp.float32 if apply_final_ln else jnp.bfloat16
    kernel = functools.partial(
        block_kernel, num_heads=num_heads, b_block=b_block, t_pad=t_pad,
        t_valid=t_valid, apply_final_ln=apply_final_ln)
    cs = lambda shape: _const_spec(shape, single_buffer)
    return pl.pallas_call(
        kernel,
        out_shape=jax.ShapeDtypeStruct((n_rows, C), out_dtype),
        grid=(grid_b,),
        in_specs=[
            pl.BlockSpec((rows, C), lambda i: (i, 0)),      # x (bf16 rows)
            cs((1, C)), cs((1, C)),                         # ln1 w, b
            cs((C, 3 * C)),                                 # w_qkv   (bf16)
            cs((C, C)), cs((1, C)),                         # w_proj, b_proj
            cs((1, C)), cs((1, C)),                         # ln2 w, b
            cs((C, H4)), cs((1, H4)),                       # w_fc1, b_fc1
            cs((H4, C)), cs((1, C)),                        # w_fc2, b_fc2
            cs((1, C)), cs((1, C)),                         # final ln w, b
        ],
        out_specs=pl.BlockSpec((rows, C), lambda i: (i, 0)),
        scratch_shapes=[pltpu.VMEM((rows, C), jnp.float32)],   # head outputs
        compiler_params=pltpu.CompilerParams(
            dimension_semantics=("parallel",),
            vmem_limit_bytes=_vmem_limit_bytes()),
    )(x2d, p["ln1_w"], p["ln1_b"], p["w_qkv"], p["w_proj"], p["b_proj"],
      p["ln2_w"], p["ln2_b"], p["w_fc1"], p["b_fc1"], p["w_fc2"], p["b_fc2"],
      ln_f[0], ln_f[1])


# ----------------------------------------------------------------------------
# Parameter construction (deterministic, synthetic).  Matmul weights stored
# as bf16 (native MXU dtype, half the HBM/VMEM bytes); LN/bias/pos in f32.
# ----------------------------------------------------------------------------
def init_params(key, *, image_size, patch_size, emb_dim, num_layer, mlp_ratio=4):
    T = (image_size // patch_size) ** 2
    H4 = mlp_ratio * emb_dim
    n_keys = 4 + num_layer * 4
    ks = list(jax.random.split(key, n_keys))

    def nrm(k, shape, std=0.02, dtype=jnp.float32):
        return (jax.random.normal(k, shape, dtype=jnp.float32) * std).astype(dtype)

    bf = jnp.bfloat16
    params = {
        "cls_token": nrm(ks[0], (1, 1, emb_dim)),
        "pos_emb": nrm(ks[1], (T, 1, emb_dim)),
        "patch_w": nrm(ks[2], (emb_dim, 3, patch_size, patch_size), dtype=bf),
        "patch_b": jnp.zeros((emb_dim,), jnp.float32),
        "ln_w": jnp.ones((1, emb_dim), jnp.float32),
        "ln_b": jnp.zeros((1, emb_dim), jnp.float32),
        "blocks": [],
    }
    ki = 4
    for _ in range(num_layer):
        blk = {
            "ln1_w": jnp.ones((1, emb_dim), jnp.float32),
            "ln1_b": jnp.zeros((1, emb_dim), jnp.float32),
            "w_qkv": nrm(ks[ki + 0], (emb_dim, 3 * emb_dim), dtype=bf),
            "w_proj": nrm(ks[ki + 1], (emb_dim, emb_dim), dtype=bf),
            "b_proj": jnp.zeros((1, emb_dim), jnp.float32),
            "ln2_w": jnp.ones((1, emb_dim), jnp.float32),
            "ln2_b": jnp.zeros((1, emb_dim), jnp.float32),
            "w_fc1": nrm(ks[ki + 2], (emb_dim, H4), dtype=bf),
            "b_fc1": jnp.zeros((1, H4), jnp.float32),
            "w_fc2": nrm(ks[ki + 3], (H4, emb_dim), dtype=bf),
            "b_fc2": jnp.zeros((1, emb_dim), jnp.float32),
        }
        params["blocks"].append(blk)
        ki += 4
    return params


# ----------------------------------------------------------------------------
# Full MAEEncoder forward
# ----------------------------------------------------------------------------
def mae_encoder_forward(img, params, *, patch_size, num_heads, ratio,
                        perm_key, return_full_features=True):
    B, Cin, H, W = img.shape
    ps = patch_size
    hb, wb = H // ps, W // ps
    T = hb * wb
    C = params["patch_w"].shape[0]
    H4 = params["blocks"][0]["w_fc1"].shape[1]

    # ---- patchify: Conv2d(3, C, ps, ps) stride ps == matmul on flat patches
    x = img.reshape(B, Cin, hb, ps, wb, ps)
    x = x.transpose(0, 2, 4, 1, 3, 5).reshape(B, T, Cin * ps * ps)    # [B,T,P]
    w_flat = params["patch_w"].reshape(C, Cin * ps * ps).T            # [P, C]
    pos_tc = params["pos_emb"][:, 0, :]                               # [T, C]
    bp = _pick_patch_block(B)
    full_btc = _robust(patch_embed, x, w_flat, params["patch_b"][None, :],
                       pos_tc, bp)                                    # bf16

    # ---- PatchShuffle (random per-batch permutation), in [B, T, C] layout
    # TODO(synk): torch uses numpy RNG per forward; here a jax.random key is
    # threaded in instead (same distribution, deterministic for the test).
    remain_T = int(T * (1 - ratio))
    keys = jax.random.split(perm_key, B)
    fwd = jnp.stack([jax.random.permutation(k, T) for k in keys], axis=-1)  # [T,B]
    bwd = jnp.argsort(fwd, axis=0)                                          # [T,B]
    shuffled = jnp.take_along_axis(full_btc, fwd.T[:, :, None], axis=1)     # [B,T,C]
    masked_btc = shuffled[:, :remain_T, :]

    cls = jnp.broadcast_to(params["cls_token"].reshape(1, 1, C),
                           (B, 1, C)).astype(jnp.bfloat16)
    ln_f = (params["ln_w"], params["ln_b"])

    def run_encoder(seq_btc):
        xs = jnp.concatenate([cls, seq_btc], axis=1)           # [B, Tseq, C]
        t_valid = xs.shape[1]
        t_pad = -(-t_valid // 8) * 8                           # sublane pad
        if t_pad != t_valid:
            xs = jnp.pad(xs, ((0, 0), (0, t_pad - t_valid), (0, 0)))
        x2d = xs.reshape(B * t_pad, C)                         # bf16 rows
        b_block = _pick_b_block(B, t_pad, C, H4)
        n_blocks = len(params["blocks"])
        # TODO(synk): on 128 MiB parts (v5e/v6e) fuse pairs of layers into one
        # pallas_call to avoid the HBM round trip of activations per layer.
        for li, blk in enumerate(params["blocks"]):
            x2d = _robust(transformer_block, x2d, blk, ln_f,
                          num_heads=num_heads, b_block=b_block,
                          t_pad=t_pad, t_valid=t_valid,
                          apply_final_ln=(li == n_blocks - 1))  # fused final LN
        xs = x2d.reshape(B, t_pad, C)[:, :t_valid, :]
        return xs.transpose(1, 0, 2)                            # [Tseq, B, C] f32

    masked_features = run_encoder(masked_btc)
    if return_full_features:
        full_features = run_encoder(full_btc)
        return masked_features, full_features, bwd
    return masked_features, None, bwd


# ----------------------------------------------------------------------------
if __name__ == "__main__":
    # small config consistent with the module's structure
    image_size = 16
    patch_size = 2
    emb_dim = 32
    num_layer = 2
    num_head = 2
    batch = 2
    mask_ratios = [0.75, 0.4, 0.1]
    mask_ratios_probs = [0.6, 0.2, 0.2]

    root = jax.random.PRNGKey(0)
    k_img, k_params, k_perm = jax.random.split(root, 3)

    img = jax.random.normal(k_img, (batch, 3, image_size, image_size),
                            dtype=jnp.float32)
    params = init_params(k_params, image_size=image_size,
                         patch_size=patch_size, emb_dim=emb_dim,
                         num_layer=num_layer)

    # deterministic stand-in for numpy.random.choice(mask_ratios, p=probs)
    rng = np.random.default_rng(0)
    ratio = float(rng.choice(mask_ratios, p=mask_ratios_probs))

    masked_features, full_features, backward_indexes = mae_encoder_forward(
        img, params, patch_size=patch_size, num_heads=num_head,
        ratio=ratio, perm_key=k_perm, return_full_features=True)

    jax.block_until_ready((masked_features, full_features, backward_indexes))

    T = (image_size // patch_size) ** 2
    remain_T = int(T * (1 - ratio))
    assert masked_features.shape == (remain_T + 1, batch, emb_dim)
    assert full_features.shape == (T + 1, batch, emb_dim)
    assert backward_indexes.shape == (T, batch)
    assert bool(jnp.all(jnp.isfinite(masked_features)))
    assert bool(jnp.all(jnp.isfinite(full_features)))
    print("KERNEL_OK")
</pallas_src>

<mosaic_0001>
module attributes {stable_mosaic.version = 11 : i64} {
  func.func @patchify_kernel(%arg0: i32, %arg1: memref<64x12xbf16, #tpu.memory_space<vmem>>, %arg2: memref<12x32xbf16, #tpu.memory_space<vmem>>, %arg3: memref<1x32xf32, #tpu.memory_space<vmem>>, %arg4: memref<64x32xf32, #tpu.memory_space<vmem>>, %arg5: memref<64x32xbf16, #tpu.memory_space<vmem>>) attributes {dimension_semantics = [#tpu.dimension_semantics<parallel>], iteration_bounds = array<i64: 2>, scalar_prefetch = 0 : i64, scratch_operands = 0 : i64, tpu.core_type = #tpu.core_type<tc>, window_params = [{transform_indices = @transform_0, window_bounds = array<i64: 64, 12>}, {pipeline_mode = #tpu.pipeline_mode<synchronous>, transform_indices = @transform_1, window_bounds = array<i64: 12, 32>}, {pipeline_mode = #tpu.pipeline_mode<synchronous>, transform_indices = @transform_2, window_bounds = array<i64: 1, 32>}, {pipeline_mode = #tpu.pipeline_mode<synchronous>, transform_indices = @transform_3, window_bounds = array<i64: 64, 32>}, {transform_indices = @transform_4, window_bounds = array<i64: 64, 32>}]} {
    %c0 = arith.constant 0 : index
    %c0_0 = arith.constant 0 : index
    %0 = vector.load %arg1[%c0, %c0_0] : memref<64x12xbf16, #tpu.memory_space<vmem>>, vector<64x12xbf16>
    %c0_1 = arith.constant 0 : index
    %c0_2 = arith.constant 0 : index
    %1 = vector.load %arg2[%c0_1, %c0_2] : memref<12x32xbf16, #tpu.memory_space<vmem>>, vector<12x32xbf16>
    %cst = arith.constant dense<0.000000e+00> : vector<64x32xf32>
    %2 = tpu.matmul %0, %1, %cst {dimension_numbers = #tpu.dot_dimension_numbers<[1], [0], [0], [1], [0, 0, 1, 1], [], []>} : vector<64x12xbf16>, vector<12x32xbf16>, vector<64x32xf32> -> vector<64x32xf32>
    %c0_3 = arith.constant 0 : index
    %c0_4 = arith.constant 0 : index
    %3 = vector.load %arg3[%c0_3, %c0_4] : memref<1x32xf32, #tpu.memory_space<vmem>>, vector<1x32xf32>
    %4 = vector.broadcast %3 : vector<1x32xf32> to vector<64x32xf32>
    %5 = arith.addf %2, %4 : vector<64x32xf32>
    %c0_5 = arith.constant 0 : index
    %c0_6 = arith.constant 0 : index
    %6 = vector.load %arg4[%c0_5, %c0_6] : memref<64x32xf32, #tpu.memory_space<vmem>>, vector<64x32xf32>
    %7 = arith.addf %5, %6 : vector<64x32xf32>
    %8 = arith.truncf %7 : vector<64x32xf32> to vector<64x32xbf16>
    %c0_7 = arith.constant 0 : index
    %c0_8 = arith.constant 0 : index
    %9 = vector.load %arg5[%c0_7, %c0_8] : memref<64x32xbf16, #tpu.memory_space<vmem>>, vector<64x32xbf16>
    tpu.vector_store %arg5[%c0_7, %c0_8], %8 {strides = array<i32>} : memref<64x32xbf16, #tpu.memory_space<vmem>>, vector<64x32xbf16>,
    return
  }
  func.func @transform_0(%arg0: i32) -> (i32, i32) {
    %c0_i32 = arith.constant 0 : i32
    %c0_i32_0 = arith.constant 0 : i32
    return %arg0, %c0_i32 : i32, i32
  }
  func.func @transform_1(%arg0: i32) -> (i32, i32) {
    %c0_i32 = arith.constant 0 : i32
    %c0_i32_0 = arith.constant 0 : i32
    %c0_i32_1 = arith.constant 0 : i32
    return %c0_i32, %c0_i32_0 : i32, i32
  }
  func.func @transform_2(%arg0: i32) -> (i32, i32) {
    %c0_i32 = arith.constant 0 : i32
    %c0_i32_0 = arith.constant 0 : i32
    %c0_i32_1 = arith.constant 0 : i32
    return %c0_i32, %c0_i32_0 : i32, i32
  }
  func.func @transform_3(%arg0: i32) -> (i32, i32) {
    %c0_i32 = arith.constant 0 : i32
    %c0_i32_0 = arith.constant 0 : i32
    %c0_i32_1 = arith.constant 0 : i32
    return %c0_i32, %c0_i32_0 : i32, i32
  }
  func.func @transform_4(%arg0: i32) -> (i32, i32) {
    %c0_i32 = arith.constant 0 : i32
    %c0_i32_0 = arith.constant 0 : i32
    return %arg0, %c0_i32 : i32, i32
  }
}

module attributes {stable_mosaic.version = 11 : i64} {
  func.func @patchify_kernel(%arg0: i32, %arg1: memref<64x12xbf16, #tpu.memory_space<vmem>>, %arg2: memref<12x32xbf16, #tpu.memory_space<vmem>>, %arg3: memref<1x32xf32, #tpu.memory_space<vmem>>, %arg4: memref<64x32xf32, #tpu.memory_space<vmem>>, %arg5: memref<64x32xbf16, #tpu.memory_space<vmem>>) attributes {dimension_semantics = [#tpu.dimension_semantics<parallel>], iteration_bounds = array<i64: 2>, scalar_prefetch = 0 : i64, scratch_operands = 0 : i64, tpu.core_type = #tpu.core_type<tc>, window_params = [{transform_indices = @transform_0, window_bounds = array<i64: 64, 12>}, {pipeline_mode = #tpu.pipeline_mode<synchronous>, transform_indices = @transform_1, window_bounds = array<i64: 12, 32>}, {pipeline_mode = #tpu.pipeline_mode<synchronous>, transform_indices = @transform_2, window_bounds = array<i64: 1, 32>}, {pipeline_mode = #tpu.pipeline_mode<synchronous>, transform_indices = @transform_3, window_bounds = array<i64: 64, 32>}, {transform_indices = @transform_4, window_bounds = array<i64: 64, 32>}]} {
    %c0 = arith.constant 0 : index
    %c0_0 = arith.constant 0 : index
    %0 = vector.load %arg1[%c0, %c0_0] : memref<64x12xbf16, #tpu.memory_space<vmem>>, vector<64x12xbf16>
    %c0_1 = arith.constant 0 : index
    %c0_2 = arith.constant 0 : index
    %1 = vector.load %arg2[%c0_1, %c0_2] : memref<12x32xbf16, #tpu.memory_space<vmem>>, vector<12x32xbf16>
    %cst = arith.constant dense<0.000000e+00> : vector<64x32xf32>
    %2 = tpu.matmul %0, %1, %cst {dimension_numbers = #tpu.dot_dimension_numbers<[1], [0], [0], [1], [0, 0, 1, 1], [], []>} : vector<64x12xbf16>, vector<12x32xbf16>, vector<64x32xf32> -> vector<64x32xf32>
    %c0_3 = arith.constant 0 : index
    %c0_4 = arith.constant 0 : index
    %3 = vector.load %arg3[%c0_3, %c0_4] : memref<1x32xf32, #tpu.memory_space<vmem>>, vector<1x32xf32>
    %4 = vector.broadcast %3 : vector<1x32xf32> to vector<64x32xf32>
    %5 = arith.addf %2, %4 : vector<64x32xf32>
    %c0_5 = arith.constant 0 : index
    %c0_6 = arith.constant 0 : index
    %6 = vector.load %arg4[%c0_5, %c0_6] : memref<64x32xf32, #tpu.memory_space<vmem>>, vector<64x32xf32>
    %7 = arith.addf %5, %6 : vector<64x32xf32>
    %8 = arith.truncf %7 : vector<64x32xf32> to vector<64x32xbf16>
    %c0_7 = arith.constant 0 : index
    %c0_8 = arith.constant 0 : index
    %9 = vector.load %arg5[%c0_7, %c0_8] : memref<64x32xbf16, #tpu.memory_space<vmem>>, vector<64x32xbf16>
    tpu.vector_store %arg5[%c0_7, %c0_8], %8 {strides = array<i32>} : memref<64x32xbf16, #tpu.memory_space<vmem>>, vector<64x32xbf16>,
    return
  }
  func.func @transform_0(%arg0: i32) -> (i32, i32) {
    %c0_i32 = arith.constant 0 : i32
    %c0_i32_0 = arith.constant 0 : i32
    return %arg0, %c0_i32 : i32, i32
  }
  func.func @transform_1(%arg0: i32) -> (i32, i32) {
    %c0_i32 = arith.constant 0 : i32
    %c0_i32_0 = arith.constant 0 : i32
    %c0_i32_1 = arith.constant 0 : i32
    return %c0_i32, %c0_i32_0 : i32, i32
  }
  func.func @transform_2(%arg0: i32) -> (i32, i32) {
    %c0_i32 = arith.constant 0 : i32
    %c0_i32_0 = arith.constant 0 : i32
    %c0_i32_1 = arith.constant 0 : i32
    return %c0_i32, %c0_i32_0 : i32, i32
  }
  func.func @transform_3(%arg0: i32) -> (i32, i32) {
    %c0_i32 = arith.constant 0 : i32
    %c0_i32_0 = arith.constant 0 : i32
    %c0_i32_1 = arith.constant 0 : i32
    return %c0_i32, %c0_i32_0 : i32, i32
  }
  func.func @transform_4(%arg0: i32) -> (i32, i32) {
    %c0_i32 = arith.constant 0 : i32
    %c0_i32_0 = arith.constant 0 : i32
    return %arg0, %c0_i32 : i32, i32
  }
}

</mosaic_0001>

<llo_original>
// kernel: tpu_custom_call.1
$region0: #{tpu_custom_call.1}
  #allocation0 [shape = 'u32[]', space=smem, size = 0x4, offset = 0x4, fixed_abs, tag = 'smem constant byte address 0x4 - core index']
  #allocation1 [shape = 'u32[72,128]{1,0:T(1,128)}', space=vmem, size = 0x9000, scoped, tag = 'internal scratch']
  %s0 = inlined_call_operand.vmem [shape: bf16[128,12], index: 0, kind: input, shape index: {}]
  %s1 = inlined_call_operand.vmem [shape: bf16[12,32], index: 1, kind: input, shape index: {}]
  %s2 = inlined_call_operand.vmem [shape: f32[1,32], index: 2, kind: input, shape index: {}]
  %s3 = inlined_call_operand.vmem [shape: f32[64,32], index: 3, kind: input, shape index: {}]
  %s4 = inlined_call_operand.vmem [shape: bf16[128,32], index: 4, kind: output, shape index: {}]
  %s5 = sld [smem:[#allocation0]]
  $region49: #{tpu_custom_call.1} parent=0
    _
  %s7 = ssub.s32 1, %s5
  %s8 = scalar_select 0, %s7, %s5
  loop: start=0, step=1, limit=4
  $region2: #{tpu_custom_call.1} parent=0 // loop_pre_header
    _
  $region3: #{tpu_custom_call.1} parent=0 // loop_header
    %s10 = sphi 0, %s14
    %p11 = scmp.ge.s32.totalorder %s10, 4
    %s20 = sphi 0, %s22
    %s23 = sphi 0, %s20
    %s24 = sphi 0, %s23
    %s40 = sphi 0, %s24
    %s44 = sphi 0, %s44
    %s46 = sphi 0, %s44
    %s47 = sphi 0, %s46
    %s61 = sphi 0, %s47
    %s65 = sphi 0, %s65
    %s67 = sphi 0, %s65
    %s68 = sphi 0, %s67
    %s82 = sphi 0, %s68
    %s86 = sphi 0, %s86
    %s88 = sphi 0, %s86
    %s89 = sphi 0, %s88
    %s103 = sphi 0, %s89
    %s109 = sphi 0, %s111
    %s112 = sphi 0, %s109
    %s113 = sphi 0, %s112
    %s129 = sphi 0, %s113
  $region4: #{tpu_custom_call.1} parent=0 // loop_header_branch
    %13 = sbr.rel (%p11) target = $region8
  $region5: #{tpu_custom_call.1} parent=0 // loop_body
    %s15 = ssub.s32 %s10, 1
    %s16 = ssub.s32 %s10, 2
    %s17 = sadd.s32 %s10, 1
    %s18 = ssub.s32 %s10, %s17
    %p19 = scmp.eq.s32.totalorder %s18, 0
    %s21 = sadd.s32 %s20, 1
    %s22 = scalar_select %p19, %s20, %s21
    %p25 = pneg %p19
    %p26 = scmp.eq.s32.totalorder %s10, 1
    %p27 = por %p25, %p26
    %p28 = scmp.ne.s32.totalorder %s20, %s23
    %p29 = scmp.eq.s32.totalorder %s10, 0
    %p30 = por %p28, %p29
    %p31 = scmp.ne.s32.totalorder %s20, %s23
    %p32 = scmp.eq.s32.totalorder %s15, 1
    %p33 = por %p31, %p32
    %p34 = scmp.ne.s32.totalorder %s23, %s24
    %p35 = scmp.eq.s32.totalorder %s15, 0
    %p36 = por %p34, %p35
    %p37 = scmp.ne.s32.totalorder %s23, %s24
    %p38 = scmp.eq.s32.totalorder %s16, 1
    %p39 = por %p37, %p38
    %p41 = scmp.ne.s32.totalorder %s24, %s40
    %p42 = scmp.eq.s32.totalorder %s16, 0
    %p43 = por %p41, %p42
    %s45 = sadd.s32 %s44, 1
    %p48 = scmp.eq.s32.totalorder %s10, 1
    %p49 = scmp.ne.s32.totalorder %s44, %s46
    %p50 = scmp.eq.s32.totalorder %s10, 0
    %p51 = por %p49, %p50
    %p52 = scmp.ne.s32.totalorder %s44, %s46
    %p53 = scmp.eq.s32.totalorder %s15, 1
    %p54 = por %p52, %p53
    %p55 = scmp.ne.s32.totalorder %s46, %s47
    %p56 = scmp.eq.s32.totalorder %s15, 0
    %p57 = por %p55, %p56
    %p58 = scmp.ne.s32.totalorder %s46, %s47
    %p59 = scmp.eq.s32.totalorder %s16, 1
    %p60 = por %p58, %p59
    %p62 = scmp.ne.s32.totalorder %s47, %s61
    %p63 = scmp.eq.s32.totalorder %s16, 0
    %p64 = por %p62, %p63
    %s66 = sadd.s32 %s65, 1
    %p69 = scmp.eq.s32.totalorder %s10, 1
    %p70 = scmp.ne.s32.totalorder %s65, %s67
    %p71 = scmp.eq.s32.totalorder %s10, 0
    %p72 = por %p70, %p71
    %p73 = scmp.ne.s32.totalorder %s65, %s67
    %p74 = scmp.eq.s32.totalorder %s15, 1
    %p75 = por %p73, %p74
    %p76 = scmp.ne.s32.totalorder %s67, %s68
    %p77 = scmp.eq.s32.totalorder %s15, 0
    %p78 = por %p76, %p77
    %p79 = scmp.ne.s32.totalorder %s67, %s68
    %p80 = scmp.eq.s32.totalorder %s16, 1
    %p81 = por %p79, %p80
    %p83 = scmp.ne.s32.totalorder %s68, %s82
    %p84 = scmp.eq.s32.totalorder %s16, 0
    %p85 = por %p83, %p84
    %s87 = sadd.s32 %s86, 1
    %p90 = scmp.eq.s32.totalorder %s10, 1
    %p91 = scmp.ne.s32.totalorder %s86, %s88
    %p92 = scmp.eq.s32.totalorder %s10, 0
    %p93 = por %p91, %p92
    %p94 = scmp.ne.s32.totalorder %s86, %s88
    %p95 = scmp.eq.s32.totalorder %s15, 1
    %p96 = por %p94, %p95
    %p97 = scmp.ne.s32.totalorder %s88, %s89
    %p98 = scmp.eq.s32.totalorder %s15, 0
    %p99 = por %p97, %p98
    %p100 = scmp.ne.s32.totalorder %s88, %s89
    %p101 = scmp.eq.s32.totalorder %s16, 1
    %p102 = por %p100, %p101
    %p104 = scmp.ne.s32.totalorder %s89, %s103
    %p105 = scmp.eq.s32.totalorder %s16, 0
    %p106 = por %p104, %p105
    %s107 = ssub.s32 %s10, %s17
    %p108 = scmp.eq.s32.totalorder %s107, 0
    %s110 = sadd.s32 %s109, 1
    %s111 = scalar_select %p108, %s109, %s110
    %p114 = pneg %p108
    %p115 = scmp.eq.s32.totalorder %s10, 1
    %p116 = por %p114, %p115
    %p117 = scmp.ne.s32.totalorder %s109, %s112
    %p118 = scmp.eq.s32.totalorder %s10, 0
    %p119 = por %p117, %p118
    %p120 = scmp.ne.s32.totalorder %s109, %s112
    %p121 = scmp.eq.s32.totalorder %s15, 1
    %p122 = por %p120, %p121
    %p123 = scmp.ne.s32.totalorder %s112, %s113
    %p124 = scmp.eq.s32.totalorder %s15, 0
    %p125 = por %p123, %p124
    %p126 = scmp.ne.s32.totalorder %s112, %s113
    %p127 = scmp.eq.s32.totalorder %s16, 1
    %p128 = por %p126, %p127
    %p130 = scmp.ne.s32.totalorder %s113, %s129
    %p131 = scmp.eq.s32.totalorder %s16, 0
    %p132 = por %p130, %p131
    %p133 = scmp.le.s32.totalorder 1, %s10
    %p134 = scmp.lt.s32.totalorder %s10, 3
    %p135 = pnand %p133, %p134
    %p136 = pneg %p135
    // Predicated region
    $region9: #{tpu_custom_call.1} parent=5 // pred_check
      _
    $region10: #{tpu_custom_call.1} parent=5 // pred_check_branch
      %138 = sbr.rel (%p135) target = $region12
    $region11: #{tpu_custom_call.1} parent=5 // pred_region
      %s139 = ssub.s32 %s10, 1
      // Predicated region
      $region13: #{tpu_custom_call.1} parent=11 // pred_check
        %p140 = pneg %p57
      $region14: #{tpu_custom_call.1} parent=11 // pred_check_branch
        %142 = sbr.rel (%p140) target = $region16
      $region15: #{tpu_custom_call.1} parent=11 // pred_region
        _
      $region16: #{tpu_custom_call.1} parent=11 // pred_fallthru
        _
      // Predicated region
      $region17: #{tpu_custom_call.1} parent=11 // pred_check
        %p143 = pneg %p78
      $region18: #{tpu_custom_call.1} parent=11 // pred_check_branch
        %145 = sbr.rel (%p143) target = $region20
      $region19: #{tpu_custom_call.1} parent=11 // pred_region
        _
      $region20: #{tpu_custom_call.1} parent=11 // pred_fallthru
        _
      // Predicated region
      $region21: #{tpu_custom_call.1} parent=11 // pred_check
        %p146 = pneg %p99
      $region22: #{tpu_custom_call.1} parent=11 // pred_check_branch
        %148 = sbr.rel (%p146) target = $region24
      $region23: #{tpu_custom_call.1} parent=11 // pred_region
        _
      $region24: #{tpu_custom_call.1} parent=11 // pred_fallthru
        _
    $region12: #{tpu_custom_call.1} parent=5 // pred_fallthru
      _
    %p149 = scmp.lt.s32.totalorder %s10, 2
    // Predicated region
    $region25: #{tpu_custom_call.1} parent=5 // pred_check
      %p150 = pneg %p149
    $region26: #{tpu_custom_call.1} parent=5 // pred_check_branch
      %152 = sbr.rel (%p150) target = $region28
    $region27: #{tpu_custom_call.1} parent=5 // pred_region
      // Predicated region
      $region29: #{tpu_custom_call.1} parent=27 // pred_check
        %p153 = pneg %p30
      $region30: #{tpu_custom_call.1} parent=27 // pred_check_branch
        %155 = sbr.rel (%p153) target = $region32
      $region31: #{tpu_custom_call.1} parent=27 // pred_region
        %s156 = smul.u32 8, %s10
        %p157 = scmp.lt.s32.totalorder %s156, 15
        %s158 = scalar_select %p157, %s156, 15
        %s159 = smul.addr %s158, 4
        %s160 = scalar_lea.vmem %s0, %s159
        %s161 = smul.u32 8, %s10
      $region32: #{tpu_custom_call.1} parent=27 // pred_fallthru
        _
    $region28: #{tpu_custom_call.1} parent=5 // pred_fallthru
      _
    %p162 = scmp.le.s32.totalorder 1, %s10
    %p163 = scmp.lt.s32.totalorder %s10, 3
    %p164 = pnand %p162, %p163
    %p165 = pneg %p164
    // Predicated region
    $region33: #{tpu_custom_call.1} parent=5 // pred_check
      _
    $region34: #{tpu_custom_call.1} parent=5 // pred_check_branch
      %167 = sbr.rel (%p164) target = $region36
    $region35: #{tpu_custom_call.1} parent=5 // pred_region
      %s168 = ssub.s32 %s10, 1
      %s169 = smul.u32 8, %s15
      %p170 = scmp.lt.s32.totalorder %s169, 15
      %s171 = scalar_select %p170, %s169, 15
      %s172 = smul.addr %s171, 4
      %s173 = scalar_lea.vmem %s0, %s172
      %p174 = pneg %p36
      %p175 = pneg %p33
      %p176 = pneg %p57
      %p177 = pneg %p54
      %p178 = pneg %p78
      %p179 = pneg %p75
      %p180 = pneg %p99
      %p181 = pneg %p96
      %p182 = pneg %p125
      %p183 = pneg %p122
      %s184 = smul.u32 8, %s15
      %p185 = scmp.lt.s32.totalorder %s184, 15
      %s186 = scalar_select %p185, %s184, 15
      %s187 = smul.addr %s186, 4
      %s188 = scalar_lea.vmem %s4, %s187
      %s189 = smul.u32 8, %s15
      %p190 = scmp.lt.s32.totalorder %s189, 15
      %s191 = scalar_select %p190, %s189, 15
      %s192 = smul.addr %s191, 4
      %s193 = scalar_lea.vmem %s0, %s192
      %s194 = smul.u32 8, %s15
      %s195 = smul.u32 8, %s15
      %p196 = scmp.lt.s32.totalorder %s195, 15
      %s197 = scalar_select %p196, %s195, 15
      %s198 = smul.addr %s197, 4
      %s199 = scalar_lea.vmem %s4, %s198
      %s200 = smul.u32 8, %s15
      %v202 = vld [vmem:[%s193] sm:$0xf]
      %v203 = vld [vmem:[%s193 + $0x4] sm:$0xf]
      %v204 = vld [vmem:[%s193 + $0x8] sm:$0xf]
      %v205 = vld [vmem:[%s193 + $0xc] sm:$0xf]
      %v206 = vld [vmem:[%s193 + $0x10] sm:$0xf]
      %v207 = vld [vmem:[%s193 + $0x14] sm:$0xf]
      %v208 = vld [vmem:[%s193 + $0x18] sm:$0xf]
      %v209 = vld [vmem:[%s193 + $0x1c] sm:$0xf]
      %v210 = vld [vmem:[%s1] sm:$0xf]
      %v211 = vld [vmem:[%s1 + $0x4] sm:$0x3]
      %v212 = vld [vmem:[%s2] sm:$0x1]
      %v214 = vperm.slane %v212, 0
      %v224 = vunpack.c.l.b16 %v202
      %v225 = vunpack.c.l.b16 %v203
      %v226 = vunpack.c.l.b16 %v204
      %v227 = vunpack.c.l.b16 %v205
      %v228 = vunpack.c.l.b16 %v206
      %v229 = vunpack.c.l.b16 %v207
      %v230 = vunpack.c.l.b16 %v208
      %v231 = vunpack.c.l.b16 %v209
      %v232 = vpack.c.b16 %v225, %v224
      %v233 = vpack.c.b16 %v227, %v226
      %v234 = vpack.c.b16 %v229, %v228
      %v235 = vpack.c.b16 %v231, %v230
      %v238 = vunpack.c.l.b16 %v210
      %v239 = vunpack.c.l.b16 %v211
      %v240 = vpack.c.b16 %v239, %v238
      %vm241 = vcmask 97280
      %v243 = vsel %vm241, %v232, 0
      %v246 = vsel %vm241, %v233, 0
      %v249 = vsel %vm241, %v234, 0
      %v252 = vsel %vm241, %v235, 0
      %vm254 = vcmask 1045504
      %v256 = vsel %vm254, %v240, 0
      %258 = vmatpush.bf16.msra.mxu0 0
      %259 = vmatpush.bf16.msra.mxu0 0
      %260 = vmatpush.bf16.msra.mxu0 0
      %261 = vmatpush.bf16.msra.mxu0 0
      %262 = vmatpush.bf16.msra.mxu0 0
      %263 = vmatpush.bf16.msra.mxu0 0
      %264 = vmatpush.bf16.msra.mxu0 0
      %265 = vmatpush.bf16.msra.mxu0 %v256
      %266 = vmatmul.bf16.gmra.mxu0 %v243
      %v267 = vpop.f32.mrf.mxu0
      %v268 = vadd.f32 %v214, %v267
      %v269 = vpop.f32.mrf.mxu0
      %v270 = vadd.f32 %v214, %v269
      %271 = vmatmul.bf16.gmra.mxu0 %v246
      %v272 = vpop.f32.mrf.mxu0
      %v273 = vadd.f32 %v214, %v272
      %v274 = vpop.f32.mrf.mxu0
      %v275 = vadd.f32 %v214, %v274
      %276 = vmatmul.bf16.gmra.mxu0 %v249
      %v277 = vpop.f32.mrf.mxu0
      %v278 = vadd.f32 %v214, %v277
      %v279 = vpop.f32.mrf.mxu0
      %v280 = vadd.f32 %v214, %v279
      %281 = vmatmul.bf16.gmra.mxu0 %v252
      %v282 = vpop.f32.mrf.mxu0
      %v283 = vadd.f32 %v214, %v282
      %v284 = vpop.f32.mrf.mxu0
      %v285 = vadd.f32 %v214, %v284
      %286 = vdwg.mxu0
      %v287 = vld [vmem:[%s3] sm:$0xff]
      %v288 = vld [vmem:[%s3 + $0x8] sm:$0xff]
      %v289 = vld [vmem:[%s3 + $0x10] sm:$0xff]
      %v290 = vld [vmem:[%s3 + $0x18] sm:$0xff]
      %v291 = vld [vmem:[%s3 + $0x20] sm:$0xff]
      %v292 = vld [vmem:[%s3 + $0x28] sm:$0xff]
      %v293 = vld [vmem:[%s3 + $0x30] sm:$0xff]
      %v294 = vld [vmem:[%s3 + $0x38] sm:$0xff]
      %v295 = vadd.f32 %v268, %v287
      %v296 = vadd.f32 %v270, %v288
      %v297 = vadd.f32 %v273, %v289
      %v298 = vadd.f32 %v275, %v290
      %v299 = vadd.f32 %v278, %v291
      %v300 = vadd.f32 %v280, %v292
      %v301 = vadd.f32 %v283, %v293
      %v302 = vadd.f32 %v285, %v294
      %v303 = vpack.c.bf16 %v295, %v295
      %v304 = vpack.c.bf16 %v296, %v296
      %v305 = vpack.c.bf16 %v297, %v297
      %v306 = vpack.c.bf16 %v298, %v298
      %v307 = vpack.c.bf16 %v299, %v299
      %v308 = vpack.c.bf16 %v300, %v300
      %v309 = vpack.c.bf16 %v301, %v301
      %v310 = vpack.c.bf16 %v302, %v302
      %vm311 = vcmask 257024
      %312 = vst.msk [vmem:[%s199] sm:$0xf] %vm311, %v303
      %313 = vst.msk [vmem:[%s199 + $0x4] sm:$0xf] %vm311, %v304
      %314 = vst.msk [vmem:[%s199 + $0x8] sm:$0xf] %vm311, %v305
      %315 = vst.msk [vmem:[%s199 + $0xc] sm:$0xf] %vm311, %v306
      %316 = vst.msk [vmem:[%s199 + $0x10] sm:$0xf] %vm311, %v307
      %317 = vst.msk [vmem:[%s199 + $0x14] sm:$0xf] %vm311, %v308
      %318 = vst.msk [vmem:[%s199 + $0x18] sm:$0xf] %vm311, %v309
      %319 = vst.msk [vmem:[%s199 + $0x1c] sm:$0xf] %vm311, %v310
      %s320 = smul.u32 8, %s15
      %p321 = scmp.lt.s32.totalorder %s320, 15
      %s322 = scalar_select %p321, %s320, 15
      %s323 = smul.addr %s322, 4
      %s324 = scalar_lea.vmem %s4, %s323
      // Predicated region
      $region37: #{tpu_custom_call.1} parent=35 // pred_check
        %p325 = pneg %p122
      $region38: #{tpu_custom_call.1} parent=35 // pred_check_branch
        %327 = sbr.rel (%p325) target = $region40
      $region39: #{tpu_custom_call.1} parent=35 // pred_region
        %s328 = smul.u32 8, %s15
      $region40: #{tpu_custom_call.1} parent=35 // pred_fallthru
        _
    $region36: #{tpu_custom_call.1} parent=5 // pred_fallthru
      _
    %p329 = scmp.le.s32.totalorder 2, %s10
    // Predicated region
    $region41: #{tpu_custom_call.1} parent=5 // pred_check
      %p330 = pneg %p329
    $region42: #{tpu_custom_call.1} parent=5 // pred_check_branch
      %332 = sbr.rel (%p330) target = $region44
    $region43: #{tpu_custom_call.1} parent=5 // pred_region
      %s333 = ssub.s32 %s10, 2
      // Predicated region
      $region45: #{tpu_custom_call.1} parent=43 // pred_check
        %p334 = pneg %p128
      $region46: #{tpu_custom_call.1} parent=43 // pred_check_branch
        %336 = sbr.rel (%p334) target = $region48
      $region47: #{tpu_custom_call.1} parent=43 // pred_region
        %s337 = smul.u32 8, %s16
        %p338 = scmp.lt.s32.totalorder %s337, 15
        %s339 = scalar_select %p338, %s337, 15
        %s340 = smul.addr %s339, 4
        %s341 = scalar_lea.vmem %s4, %s340
      $region48: #{tpu_custom_call.1} parent=43 // pred_fallthru
        _
    $region44: #{tpu_custom_call.1} parent=5 // pred_fallthru
      _
  $region6: #{tpu_custom_call.1} parent=0 // loop_footer
    %s14 = sadd.s32 1, %s10
  $region7: #{tpu_custom_call.1} parent=0 // loop_footer_branch
    %9 = sbr.rel target = $region3
  $region8: #{tpu_custom_call.1} parent=0 // loop_exit
    _

// kernel: tpu_custom_call.1
$region0: #{tpu_custom_call.1}
  #allocation0 [shape = 'u32[]', space=smem, size = 0x4, offset = 0x4, fixed_abs, tag = 'smem constant byte address 0x4 - core index']
  #allocation1 [shape = 'u32[72,128]{1,0:T(1,128)}', space=vmem, size = 0x9000, scoped, tag = 'internal scratch']
  %s0 = inlined_call_operand.vmem [shape: bf16[128,12], index: 0, kind: input, shape index: {}]
  %s1 = inlined_call_operand.vmem [shape: bf16[12,32], index: 1, kind: input, shape index: {}]
  %s2 = inlined_call_operand.vmem [shape: f32[1,32], index: 2, kind: input, shape index: {}]
  %s3 = inlined_call_operand.vmem [shape: f32[64,32], index: 3, kind: input, shape index: {}]
  %s4 = inlined_call_operand.vmem [shape: bf16[128,32], index: 4, kind: output, shape index: {}]
  %s5 = sld [smem:[#allocation0]]
  $region49: #{tpu_custom_call.1} parent=0
    _
  %s7 = ssub.s32 1, %s5
  %s8 = scalar_select 0, %s7, %s5
  loop: start=0, step=1, limit=4
  $region2: #{tpu_custom_call.1} parent=0 // loop_pre_header
    _
  $region3: #{tpu_custom_call.1} parent=0 // loop_header
    %s10 = sphi 0, %s14
    %p11 = scmp.ge.s32.totalorder %s10, 4
    %s20 = sphi 0, %s22
    %s23 = sphi 0, %s20
    %s24 = sphi 0, %s23
    %s40 = sphi 0, %s24
    %s44 = sphi 0, %s44
    %s46 = sphi 0, %s44
    %s47 = sphi 0, %s46
    %s61 = sphi 0, %s47
    %s65 = sphi 0, %s65
    %s67 = sphi 0, %s65
    %s68 = sphi 0, %s67
    %s82 = sphi 0, %s68
    %s86 = sphi 0, %s86
    %s88 = sphi 0, %s86
    %s89 = sphi 0, %s88
    %s103 = sphi 0, %s89
    %s109 = sphi 0, %s111
    %s112 = sphi 0, %s109
    %s113 = sphi 0, %s112
    %s129 = sphi 0, %s113
  $region4: #{tpu_custom_call.1} parent=0 // loop_header_branch
    %13 = sbr.rel (%p11) target = $region8
  $region5: #{tpu_custom_call.1} parent=0 // loop_body
    %s15 = ssub.s32 %s10, 1
    %s16 = ssub.s32 %s10, 2
    %s17 = sadd.s32 %s10, 1
    %s18 = ssub.s32 %s10, %s17
    %p19 = scmp.eq.s32.totalorder %s18, 0
    %s21 = sadd.s32 %s20, 1
    %s22 = scalar_select %p19, %s20, %s21
    %p25 = pneg %p19
    %p26 = scmp.eq.s32.totalorder %s10, 1
    %p27 = por %p25, %p26
    %p28 = scmp.ne.s32.totalorder %s20, %s23
    %p29 = scmp.eq.s32.totalorder %s10, 0
    %p30 = por %p28, %p29
    %p31 = scmp.ne.s32.totalorder %s20, %s23
    %p32 = scmp.eq.s32.totalorder %s15, 1
    %p33 = por %p31, %p32
    %p34 = scmp.ne.s32.totalorder %s23, %s24
    %p35 = scmp.eq.s32.totalorder %s15, 0
    %p36 = por %p34, %p35
    %p37 = scmp.ne.s32.totalorder %s23, %s24
    %p38 = scmp.eq.s32.totalorder %s16, 1
    %p39 = por %p37, %p38
    %p41 = scmp.ne.s32.totalorder %s24, %s40
    %p42 = scmp.eq.s32.totalorder %s16, 0
    %p43 = por %p41, %p42
    %s45 = sadd.s32 %s44, 1
    %p48 = scmp.eq.s32.totalorder %s10, 1
    %p49 = scmp.ne.s32.totalorder %s44, %s46
    %p50 = scmp.eq.s32.totalorder %s10, 0
    %p51 = por %p49, %p50
    %p52 = scmp.ne.s32.totalorder %s44, %s46
    %p53 = scmp.eq.s32.totalorder %s15, 1
    %p54 = por %p52, %p53
    %p55 = scmp.ne.s32.totalorder %s46, %s47
    %p56 = scmp.eq.s32.totalorder %s15, 0
    %p57 = por %p55, %p56
    %p58 = scmp.ne.s32.totalorder %s46, %s47
    %p59 = scmp.eq.s32.totalorder %s16, 1
    %p60 = por %p58, %p59
    %p62 = scmp.ne.s32.totalorder %s47, %s61
    %p63 = scmp.eq.s32.totalorder %s16, 0
    %p64 = por %p62, %p63
    %s66 = sadd.s32 %s65, 1
    %p69 = scmp.eq.s32.totalorder %s10, 1
    %p70 = scmp.ne.s32.totalorder %s65, %s67
    %p71 = scmp.eq.s32.totalorder %s10, 0
    %p72 = por %p70, %p71
    %p73 = scmp.ne.s32.totalorder %s65, %s67
    %p74 = scmp.eq.s32.totalorder %s15, 1
    %p75 = por %p73, %p74
    %p76 = scmp.ne.s32.totalorder %s67, %s68
    %p77 = scmp.eq.s32.totalorder %s15, 0
    %p78 = por %p76, %p77
    %p79 = scmp.ne.s32.totalorder %s67, %s68
    %p80 = scmp.eq.s32.totalorder %s16, 1
    %p81 = por %p79, %p80
    %p83 = scmp.ne.s32.totalorder %s68, %s82
    %p84 = scmp.eq.s32.totalorder %s16, 0
    %p85 = por %p83, %p84
    %s87 = sadd.s32 %s86, 1
    %p90 = scmp.eq.s32.totalorder %s10, 1
    %p91 = scmp.ne.s32.totalorder %s86, %s88
    %p92 = scmp.eq.s32.totalorder %s10, 0
    %p93 = por %p91, %p92
    %p94 = scmp.ne.s32.totalorder %s86, %s88
    %p95 = scmp.eq.s32.totalorder %s15, 1
    %p96 = por %p94, %p95
    %p97 = scmp.ne.s32.totalorder %s88, %s89
    %p98 = scmp.eq.s32.totalorder %s15, 0
    %p99 = por %p97, %p98
    %p100 = scmp.ne.s32.totalorder %s88, %s89
    %p101 = scmp.eq.s32.totalorder %s16, 1
    %p102 = por %p100, %p101
    %p104 = scmp.ne.s32.totalorder %s89, %s103
    %p105 = scmp.eq.s32.totalorder %s16, 0
    %p106 = por %p104, %p105
    %s107 = ssub.s32 %s10, %s17
    %p108 = scmp.eq.s32.totalorder %s107, 0
    %s110 = sadd.s32 %s109, 1
    %s111 = scalar_select %p108, %s109, %s110
    %p114 = pneg %p108
    %p115 = scmp.eq.s32.totalorder %s10, 1
    %p116 = por %p114, %p115
    %p117 = scmp.ne.s32.totalorder %s109, %s112
    %p118 = scmp.eq.s32.totalorder %s10, 0
    %p119 = por %p117, %p118
    %p120 = scmp.ne.s32.totalorder %s109, %s112
    %p121 = scmp.eq.s32.totalorder %s15, 1
    %p122 = por %p120, %p121
    %p123 = scmp.ne.s32.totalorder %s112, %s113
    %p124 = scmp.eq.s32.totalorder %s15, 0
    %p125 = por %p123, %p124
    %p126 = scmp.ne.s32.totalorder %s112, %s113
    %p127 = scmp.eq.s32.totalorder %s16, 1
    %p128 = por %p126, %p127
    %p130 = scmp.ne.s32.totalorder %s113, %s129
    %p131 = scmp.eq.s32.totalorder %s16, 0
    %p132 = por %p130, %p131
    %p133 = scmp.le.s32.totalorder 1, %s10
    %p134 = scmp.lt.s32.totalorder %s10, 3
    %p135 = pnand %p133, %p134
    %p136 = pneg %p135
    // Predicated region
    $region9: #{tpu_custom_call.1} parent=5 // pred_check
      _
    $region10: #{tpu_custom_call.1} parent=5 // pred_check_branch
      %138 = sbr.rel (%p135) target = $region12
    $region11: #{tpu_custom_call.1} parent=5 // pred_region
      %s139 = ssub.s32 %s10, 1
      // Predicated region
      $region13: #{tpu_custom_call.1} parent=11 // pred_check
        %p140 = pneg %p57
      $region14: #{tpu_custom_call.1} parent=11 // pred_check_branch
        %142 = sbr.rel (%p140) target = $region16
      $region15: #{tpu_custom_call.1} parent=11 // pred_region
        _
      $region16: #{tpu_custom_call.1} parent=11 // pred_fallthru
        _
      // Predicated region
      $region17: #{tpu_custom_call.1} parent=11 // pred_check
        %p143 = pneg %p78
      $region18: #{tpu_custom_call.1} parent=11 // pred_check_branch
        %145 = sbr.rel (%p143) target = $region20
      $region19: #{tpu_custom_call.1} parent=11 // pred_region
        _
      $region20: #{tpu_custom_call.1} parent=11 // pred_fallthru
        _
      // Predicated region
      $region21: #{tpu_custom_call.1} parent=11 // pred_check
        %p146 = pneg %p99
      $region22: #{tpu_custom_call.1} parent=11 // pred_check_branch
        %148 = sbr.rel (%p146) target = $region24
      $region23: #{tpu_custom_call.1} parent=11 // pred_region
        _
      $region24: #{tpu_custom_call.1} parent=11 // pred_fallthru
        _
    $region12: #{tpu_custom_call.1} parent=5 // pred_fallthru
      _
    %p149 = scmp.lt.s32.totalorder %s10, 2
    // Predicated region
    $region25: #{tpu_custom_call.1} parent=5 // pred_check
      %p150 = pneg %p149
    $region26: #{tpu_custom_call.1} parent=5 // pred_check_branch
      %152 = sbr.rel (%p150) target = $region28
    $region27: #{tpu_custom_call.1} parent=5 // pred_region
      // Predicated region
      $region29: #{tpu_custom_call.1} parent=27 // pred_check
        %p153 = pneg %p30
      $region30: #{tpu_custom_call.1} parent=27 // pred_check_branch
        %155 = sbr.rel (%p153) target = $region32
      $region31: #{tpu_custom_call.1} parent=27 // pred_region
        %s156 = smul.u32 8, %s10
        %p157 = scmp.lt.s32.totalorder %s156, 15
        %s158 = scalar_select %p157, %s156, 15
        %s159 = smul.addr %s158, 4
        %s160 = scalar_lea.vmem %s0, %s159
        %s161 = smul.u32 8, %s10
      $region32: #{tpu_custom_call.1} parent=27 // pred_fallthru
        _
    $region28: #{tpu_custom_call.1} parent=5 // pred_fallthru
      _
    %p162 = scmp.le.s32.totalorder 1, %s10
    %p163 = scmp.lt.s32.totalorder %s10, 3
    %p164 = pnand %p162, %p163
    %p165 = pneg %p164
    // Predicated region
    $region33: #{tpu_custom_call.1} parent=5 // pred_check
      _
    $region34: #{tpu_custom_call.1} parent=5 // pred_check_branch
      %167 = sbr.rel (%p164) target = $region36
    $region35: #{tpu_custom_call.1} parent=5 // pred_region
      %s168 = ssub.s32 %s10, 1
      %s169 = smul.u32 8, %s15
      %p170 = scmp.lt.s32.totalorder %s169, 15
      %s171 = scalar_select %p170, %s169, 15
      %s172 = smul.addr %s171, 4
      %s173 = scalar_lea.vmem %s0, %s172
      %p174 = pneg %p36
      %p175 = pneg %p33
      %p176 = pneg %p57
      %p177 = pneg %p54
      %p178 = pneg %p78
      %p179 = pneg %p75
      %p180 = pneg %p99
      %p181 = pneg %p96
      %p182 = pneg %p125
      %p183 = pneg %p122
      %s184 = smul.u32 8, %s15
      %p185 = scmp.lt.s32.totalorder %s184, 15
      %s186 = scalar_select %p185, %s184, 15
      %s187 = smul.addr %s186, 4
      %s188 = scalar_lea.vmem %s4, %s187
      %s189 = smul.u32 8, %s15
      %p190 = scmp.lt.s32.totalorder %s189, 15
      %s191 = scalar_select %p190, %s189, 15
      %s192 = smul.addr %s191, 4
      %s193 = scalar_lea.vmem %s0, %s192
      %s194 = smul.u32 8, %s15
      %s195 = smul.u32 8, %s15
      %p196 = scmp.lt.s32.totalorder %s195, 15
      %s197 = scalar_select %p196, %s195, 15
      %s198 = smul.addr %s197, 4
      %s199 = scalar_lea.vmem %s4, %s198
      %s200 = smul.u32 8, %s15
      %v202 = vld [vmem:[%s193] sm:$0xf]
      %v203 = vld [vmem:[%s193 + $0x4] sm:$0xf]
      %v204 = vld [vmem:[%s193 + $0x8] sm:$0xf]
      %v205 = vld [vmem:[%s193 + $0xc] sm:$0xf]
      %v206 = vld [vmem:[%s193 + $0x10] sm:$0xf]
      %v207 = vld [vmem:[%s193 + $0x14] sm:$0xf]
      %v208 = vld [vmem:[%s193 + $0x18] sm:$0xf]
      %v209 = vld [vmem:[%s193 + $0x1c] sm:$0xf]
      %v210 = vld [vmem:[%s1] sm:$0xf]
      %v211 = vld [vmem:[%s1 + $0x4] sm:$0x3]
      %v212 = vld [vmem:[%s2] sm:$0x1]
      %v214 = vperm.slane %v212, 0
      %v224 = vunpack.c.l.b16 %v202
      %v225 = vunpack.c.l.b16 %v203
      %v226 = vunpack.c.l.b16 %v204
      %v227 = vunpack.c.l.b16 %v205
      %v228 = vunpack.c.l.b16 %v206
      %v229 = vunpack.c.l.b16 %v207
      %v230 = vunpack.c.l.b16 %v208
      %v231 = vunpack.c.l.b16 %v209
      %v232 = vpack.c.b16 %v225, %v224
      %v233 = vpack.c.b16 %v227, %v226
      %v234 = vpack.c.b16 %v229, %v228
      %v235 = vpack.c.b16 %v231, %v230
      %v238 = vunpack.c.l.b16 %v210
      %v239 = vunpack.c.l.b16 %v211
      %v240 = vpack.c.b16 %v239, %v238
      %vm241 = vcmask 97280
      %v243 = vsel %vm241, %v232, 0
      %v246 = vsel %vm241, %v233, 0
      %v249 = vsel %vm241, %v234, 0
      %v252 = vsel %vm241, %v235, 0
      %vm254 = vcmask 1045504
      %v256 = vsel %vm254, %v240, 0
      %258 = vmatpush.bf16.msra.mxu0 0
      %259 = vmatpush.bf16.msra.mxu0 0
      %260 = vmatpush.bf16.msra.mxu0 0
      %261 = vmatpush.bf16.msra.mxu0 0
      %262 = vmatpush.bf16.msra.mxu0 0
      %263 = vmatpush.bf16.msra.mxu0 0
      %264 = vmatpush.bf16.msra.mxu0 0
      %265 = vmatpush.bf16.msra.mxu0 %v256
      %266 = vmatmul.bf16.gmra.mxu0 %v243
      %v267 = vpop.f32.mrf.mxu0
      %v268 = vadd.f32 %v214, %v267
      %v269 = vpop.f32.mrf.mxu0
      %v270 = vadd.f32 %v214, %v269
      %271 = vmatmul.bf16.gmra.mxu0 %v246
      %v272 = vpop.f32.mrf.mxu0
      %v273 = vadd.f32 %v214, %v272
      %v274 = vpop.f32.mrf.mxu0
      %v275 = vadd.f32 %v214, %v274
      %276 = vmatmul.bf16.gmra.mxu0 %v249
      %v277 = vpop.f32.mrf.mxu0
      %v278 = vadd.f32 %v214, %v277
      %v279 = vpop.f32.mrf.mxu0
      %v280 = vadd.f32 %v214, %v279
      %281 = vmatmul.bf16.gmra.mxu0 %v252
      %v282 = vpop.f32.mrf.mxu0
      %v283 = vadd.f32 %v214, %v282
      %v284 = vpop.f32.mrf.mxu0
      %v285 = vadd.f32 %v214, %v284
      %286 = vdwg.mxu0
      %v287 = vld [vmem:[%s3] sm:$0xff]
      %v288 = vld [vmem:[%s3 + $0x8] sm:$0xff]
      %v289 = vld [vmem:[%s3 + $0x10] sm:$0xff]
      %v290 = vld [vmem:[%s3 + $0x18] sm:$0xff]
      %v291 = vld [vmem:[%s3 + $0x20] sm:$0xff]
      %v292 = vld [vmem:[%s3 + $0x28] sm:$0xff]
      %v293 = vld [vmem:[%s3 + $0x30] sm:$0xff]
      %v294 = vld [vmem:[%s3 + $0x38] sm:$0xff]
      %v295 = vadd.f32 %v268, %v287
      %v296 = vadd.f32 %v270, %v288
      %v297 = vadd.f32 %v273, %v289
      %v298 = vadd.f32 %v275, %v290
      %v299 = vadd.f32 %v278, %v291
      %v300 = vadd.f32 %v280, %v292
      %v301 = vadd.f32 %v283, %v293
      %v302 = vadd.f32 %v285, %v294
      %v303 = vpack.c.bf16 %v295, %v295
      %v304 = vpack.c.bf16 %v296, %v296
      %v305 = vpack.c.bf16 %v297, %v297
      %v306 = vpack.c.bf16 %v298, %v298
      %v307 = vpack.c.bf16 %v299, %v299
      %v308 = vpack.c.bf16 %v300, %v300
      %v309 = vpack.c.bf16 %v301, %v301
      %v310 = vpack.c.bf16 %v302, %v302
      %vm311 = vcmask 257024
      %312 = vst.msk [vmem:[%s199] sm:$0xf] %vm311, %v303
      %313 = vst.msk [vmem:[%s199 + $0x4] sm:$0xf] %vm311, %v304
      %314 = vst.msk [vmem:[%s199 + $0x8] sm:$0xf] %vm311, %v305
      %315 = vst.msk [vmem:[%s199 + $0xc] sm:$0xf] %vm311, %v306
      %316 = vst.msk [vmem:[%s199 + $0x10] sm:$0xf] %vm311, %v307
      %317 = vst.msk [vmem:[%s199 + $0x14] sm:$0xf] %vm311, %v308
      %318 = vst.msk [vmem:[%s199 + $0x18] sm:$0xf] %vm311, %v309
      %319 = vst.msk [vmem:[%s199 + $0x1c] sm:$0xf] %vm311, %v310
      %s320 = smul.u32 8, %s15
      %p321 = scmp.lt.s32.totalorder %s320, 15
      %s322 = scalar_select %p321, %s320, 15
      %s323 = smul.addr %s322, 4
      %s324 = scalar_lea.vmem %s4, %s323
      // Predicated region
      $region37: #{tpu_custom_call.1} parent=35 // pred_check
        %p325 = pneg %p122
      $region38: #{tpu_custom_call.1} parent=35 // pred_check_branch
        %327 = sbr.rel (%p325) target = $region40
      $region39: #{tpu_custom_call.1} parent=35 // pred_region
        %s328 = smul.u32 8, %s15
      $region40: #{tpu_custom_call.1} parent=35 // pred_fallthru
        _
    $region36: #{tpu_custom_call.1} parent=5 // pred_fallthru
      _
    %p329 = scmp.le.s32.totalorder 2, %s10
    // Predicated region
    $region41: #{tpu_custom_call.1} parent=5 // pred_check
      %p330 = pneg %p329
    $region42: #{tpu_custom_call.1} parent=5 // pred_check_branch
      %332 = sbr.rel (%p330) target = $region44
    $region43: #{tpu_custom_call.1} parent=5 // pred_region
      %s333 = ssub.s32 %s10, 2
      // Predicated region
      $region45: #{tpu_custom_call.1} parent=43 // pred_check
        %p334 = pneg %p128
      $region46: #{tpu_custom_call.1} parent=43 // pred_check_branch
        %336 = sbr.rel (%p334) target = $region48
      $region47: #{tpu_custom_call.1} parent=43 // pred_region
        %s337 = smul.u32 8, %s16
        %p338 = scmp.lt.s32.totalorder %s337, 15
        %s339 = scalar_select %p338, %s337, 15
        %s340 = smul.addr %s339, 4
        %s341 = scalar_lea.vmem %s4, %s340
      $region48: #{tpu_custom_call.1} parent=43 // pred_fallthru
        _
    $region44: #{tpu_custom_call.1} parent=5 // pred_fallthru
      _
  $region6: #{tpu_custom_call.1} parent=0 // loop_footer
    %s14 = sadd.s32 1, %s10
  $region7: #{tpu_custom_call.1} parent=0 // loop_footer_branch
    %9 = sbr.rel target = $region3
  $region8: #{tpu_custom_call.1} parent=0 // loop_exit
    _

</llo_original>
